<compile_context>
chip_gen: v6e
topology: v6e:2x2x1
jax: 0.10.0
libtpu: 0.0.40
codegen_flags: <defaults>
</compile_context>

<pallas_src>
import functools

import jax
import jax.numpy as jnp
from jax.experimental import pallas as pl
from jax.experimental.pallas import tpu as pltpu


def _round_up(n, m):
    return ((n + m - 1) // m) * m


@functools.lru_cache(maxsize=None)
def _roll_is_numpy_convention():
    """True iff pltpu.roll follows jnp.roll semantics: out[i] = x[(i - shift) % n]."""
    def probe(x_ref, o_ref):
        o_ref[...] = pltpu.roll(x_ref[...], 1, 1)

    x = jnp.arange(8 * 128, dtype=jnp.float32).reshape(8, 128)
    y = pl.pallas_call(
        probe, out_shape=jax.ShapeDtypeStruct((8, 128), jnp.float32))(x)
    # numpy convention -> y[0, 0] == x[0, 127] == 127 ; opposite -> == 1
    return bool(float(y[0, 0]) > 64.0)


def _qconv_kernel(w_ref, x_ref, o_ref, *, K, Wp, Lin, Lout, np_roll):
    # w_ref : SMEM (K*K,)       f32 -- VQC layer weights (qubit 0 unused)
    # x_ref : VMEM (TC, TB, Lin) f32 -- zero-padded planes, flat (row*Wp+col) on lanes
    # o_ref : VMEM (TB, Lout)    f32 -- per-batch output, accumulated over channel tiles
    x = x_ref[...]                                       # single VMEM load of the slab
    prod = None
    for p in range(K):
        for q in range(K):
            r = p * K + q
            if r == 0:
                continue                                 # qubit 0 drops out of <Z_0>
            off = p * Wp + q                             # flat shift of patch element (p, q)
            shift = (Lin - off) if np_roll else off      # == roll-left by `off` lanes
            xs = pltpu.roll(x, shift, 2)[:, :, :Lout]    # XLU shift + aligned slice
            f = jnp.cos(xs + w_ref[r])                   # EUP cos; scalar weight from SMEM
            prod = f if prod is None else prod * f       # full-tile VALU multiplies
    partial = jnp.sum(prod, axis=0)                      # reduce channel tile (leading axis)

    @pl.when(pl.program_id(1) == 0)                      # first channel tile: init output
    def _init():
        o_ref[...] = jnp.zeros_like(o_ref)

    o_ref[...] += partial


def qconv_forward(x, weights, output_filters, kernel_size=3, strides=1,
                  padding='same', n_qlayers=1):
    assert strides == 1, "TODO(synk): only strides=1 (module default) is implemented"
    assert n_qlayers == 1, "TODO(synk): closed form holds for n_qlayers=1 (module default)"
    assert kernel_size >= 2
    B, C, H, W = x.shape
    K = kernel_size
    if padding == 'same':
        assert K % 2 == 1, "'same' padding implemented for odd kernel_size"
        hp = ((H - 1) * strides - H + (K - 1) + 1) // 2
        wp = ((W - 1) * strides - W + (K - 1) + 1) // 2
    else:
        hp = wp = 0
    Ho = (H - (K - 1) + 2 * hp - 1) // strides + 1
    Wo = (W - (K - 1) + 2 * wp - 1) // strides + 1
    Hp, Wp = H + 2 * hp, W + 2 * wp

    # Flat-image layout: lane axis enumerates l*Wp + m of the padded plane.
    Lout = _round_up(Ho * Wp, 128)                       # lane-dense output slab
    Lin = _round_up(Lout + (K - 1) * (Wp + 1), 128)      # + halo for the largest shift
    assert Lin >= Hp * Wp

    # Batch tile on sublanes; channel tile on the last (reduction) grid axis.
    if B <= 8:
        TB, B_pad = B, B
    else:
        TB = 8
        B_pad = _round_up(B, TB)
    # Keep each (double-buffered) input block comfortably inside scoped VMEM on
    # every TPU generation (v7x has the smallest VMEM): <= 2 MiB per buffer.
    vmem_budget = 2 * 1024 * 1024
    tc_cap = max(1, vmem_budget // (TB * Lin * 4))
    TC = max(d for d in range(1, C + 1) if C % d == 0 and d <= tc_cap)

    # Single copy of the input: pad -> flatten -> (C, B_pad, Lin).  No im2col.
    xp = jnp.pad(x.astype(jnp.float32), ((0, 0), (0, 0), (hp, hp), (wp, wp)))
    xf = jnp.transpose(xp.reshape(B, C, Hp * Wp), (1, 0, 2))
    xf = jnp.pad(xf, ((0, 0), (0, B_pad - B), (0, Lin - Hp * Wp)))
    w_flat = jnp.asarray(weights, jnp.float32).reshape(n_qlayers, K * K)[0]

    Q = K * K - 1
    n_out = B * Ho * Wo
    cost = pl.CostEstimate(
        flops=2 * C * Q * n_out,
        transcendentals=C * Q * n_out,
        bytes_accessed=int(xf.size) * 4 + int(B_pad * Lout) * 4 + K * K * 4,
    )

    kernel = functools.partial(
        _qconv_kernel, K=K, Wp=Wp, Lin=Lin, Lout=Lout,
        np_roll=_roll_is_numpy_convention())

    out = pl.pallas_call(
        kernel,
        out_shape=jax.ShapeDtypeStruct((B_pad, Lout), jnp.float32),
        grid_spec=pltpu.PrefetchScalarGridSpec(
            num_scalar_prefetch=0,
            grid=(B_pad // TB, C // TC),
            in_specs=[
                pl.BlockSpec(memory_space=pltpu.MemorySpace.SMEM),    # VQC weights
                pl.BlockSpec((TC, TB, Lin), lambda b, c: (c, b, 0)),  # input slab
            ],
            out_specs=pl.BlockSpec((TB, Lout), lambda b, c: (b, 0)),
        ),
        compiler_params=pltpu.CompilerParams(
            dimension_semantics=("parallel", "arbitrary")),
        cost_estimate=cost,
    )(w_flat, xf)

    y = out[:B, :Ho * Wp].reshape(B, Ho, Wp)[:, :, :Wo]
    # Every output filter j shares the same VQC response in the torch module.
    return jnp.broadcast_to(y[:, None, :, :], (B, output_filters, Ho, Wo))


def _reference(x, weights, output_filters, K=3):
    # plain-JAX closed form ('same' padding, stride 1), for validation
    B, C, H, W = x.shape
    hp = (K - 1) // 2
    xp = jnp.pad(x, ((0, 0), (0, 0), (hp, hp), (hp, hp)))
    pats = jnp.stack([xp[:, :, p:p + H, q:q + W]
                      for p in range(K) for q in range(K)], axis=-1)
    expz = jnp.prod(jnp.cos(pats[..., 1:] + weights[0, 1:]), axis=-1)
    y = jnp.sum(expz, axis=1)
    return jnp.broadcast_to(y[:, None], (B, output_filters, H, W))


if __name__ == "__main__":
    key = jax.random.PRNGKey(0)
    kx, kw = jax.random.split(key)

    B, C, H, W = 2, 4, 16, 16
    output_filters = 4
    K = 3
    n_qlayers = 1

    x = jax.random.normal(kx, (B, C, H, W), dtype=jnp.float32)
    # deterministic VQC weights (PennyLane TorchLayer-style uniform [0, 2pi))
    weights = jax.random.uniform(kw, (n_qlayers, K * K),
                                 minval=0.0, maxval=2.0 * jnp.pi,
                                 dtype=jnp.float32)

    y = qconv_forward(x, weights, output_filters, kernel_size=K)
    y = jax.block_until_ready(y)

    y_ref = _reference(x, weights, output_filters, K=K)
    assert y.shape == (B, output_filters, H, W)
    assert jnp.allclose(y, y_ref, atol=2e-5), "mismatch vs JAX reference"

    print("KERNEL_OK")
</pallas_src>

<mosaic_0001>
module attributes {stable_mosaic.version = 11 : i64} {
  func.func @probe(%arg0: memref<8x128xf32, #tpu.memory_space<vmem>>, %arg1: memref<8x128xf32, #tpu.memory_space<vmem>>) attributes {dimension_semantics = [], scalar_prefetch = 0 : i64, scratch_operands = 0 : i64, tpu.core_type = #tpu.core_type<tc>} {
    %c0 = arith.constant 0 : index
    %c0_0 = arith.constant 0 : index
    %0 = vector.load %arg0[%c0, %c0_0] : memref<8x128xf32, #tpu.memory_space<vmem>>, vector<8x128xf32>
    %c1_i32 = arith.constant 1 : i32
    %1 = tpu.dynamic_rotate %0 by %c1_i32 dim 1 : vector<8x128xf32>, i32 -> vector<8x128xf32>
    %c0_1 = arith.constant 0 : index
    %c0_2 = arith.constant 0 : index
    %2 = vector.load %arg1[%c0_1, %c0_2] : memref<8x128xf32, #tpu.memory_space<vmem>>, vector<8x128xf32>
    tpu.vector_store %arg1[%c0_1, %c0_2], %1 {strides = array<i32>} : memref<8x128xf32, #tpu.memory_space<vmem>>, vector<8x128xf32>,
    return
  }
}

</mosaic_0001>

<llo_original>
// kernel: tpu_custom_call.1
$region0: #{tpu_custom_call.1}
  #allocation0 [shape = 'u32[]', space=smem, size = 0x4, offset = 0x4, fixed_abs, tag = 'smem constant byte address 0x4 - core index']
  #allocation1 [shape = 'u32[144,128]{1,0:T(1,128)}', space=vmem, size = 0x12000, scoped, tag = 'internal scratch']
  %s0 = inlined_call_operand.hbm [shape: f32[8,128], index: 0, kind: input, shape index: {}]
  %s1 = inlined_call_operand.hbm [shape: f32[8,128], index: 1, kind: output, shape index: {}]
  %s2 = sld [smem:[#allocation0]]
  $region18: #{tpu_custom_call.1} parent=0
    _
  %s4 = ssub.s32 1, %s2
  %s5 = scalar_select 0, %s4, %s2
  $region1: #{tpu_custom_call.1} parent=0
    #allocation2 [shape = 'u8[4096]{0}', space=vmem, size = 0x1000, scoped, tag = 'input window, operand 0, single buffered']
    #allocation3 [shape = 's32[1]{0}', space=sflag, size = 0x4, scoped, tag = 'scoped memory for tpu_custom_call.1']
    #allocation4 [shape = 's32[1]{0}', space=sflag, size = 0x4, scoped, tag = 'scoped memory for tpu_custom_call.1']
    #allocation5 [shape = 'u8[4096]{0}', space=vmem, size = 0x1000, scoped, tag = 'output window, operand 0, single buffered']
    %6 = vsyncpa [#allocation3], 0
    %7 = vsyncpa [#allocation4], 0
    // Predicated region
    $region2: #{tpu_custom_call.1} parent=1 // pred_check
      _
    $region3: #{tpu_custom_call.1} parent=1 // pred_check_branch
      %9 = sbr.rel (0) target = $region5
    $region4: #{tpu_custom_call.1} parent=1 // pred_region
      %s11 = ssub.s32 128, 128
      %12 = vsyncadd [#allocation3], %s11
      %s14 = sshll.u32 [#allocation2], 4
      %s15 = int_to_ptr.vmem [resolvable:$true] %s14
      %17 = dma.hbm_to_vmem [thread:$0]  %s0, 128, %s15, [#allocation3]
    $region5: #{tpu_custom_call.1} parent=1 // pred_fallthru
      _
    // Predicated region
    $region6: #{tpu_custom_call.1} parent=1 // pred_check
      _
    $region7: #{tpu_custom_call.1} parent=1 // pred_check_branch
      %19 = sbr.rel (0) target = $region9
    $region8: #{tpu_custom_call.1} parent=1 // pred_region
      %20 = dma.done [#allocation3], 128
    $region9: #{tpu_custom_call.1} parent=1 // pred_fallthru
      _
    %v21 = vld [vmem:[#allocation2] sm:$0xff]
    %22 = vrot.lane.b32.xlu0 %v21, 1
    %v23 = vpop.permute.xlu0 %22
    %24 = vst [vmem:[#allocation5] sm:$0xff] %v23
    // Predicated region
    $region10: #{tpu_custom_call.1} parent=1 // pred_check
      _
    $region11: #{tpu_custom_call.1} parent=1 // pred_check_branch
      %26 = sbr.rel (0) target = $region13
    $region12: #{tpu_custom_call.1} parent=1 // pred_region
      %s28 = ssub.s32 128, 128
      %29 = vsyncadd [#allocation4], %s28
      %s31 = sshll.u32 [#allocation5], 4
      %s32 = int_to_ptr.vmem [resolvable:$true] %s31
      %34 = dma.vmem_to_hbm [thread:$0]  %s32, 128, %s1, [#allocation4]
    $region13: #{tpu_custom_call.1} parent=1 // pred_fallthru
      _
    // Predicated region
    $region14: #{tpu_custom_call.1} parent=1 // pred_check
      _
    $region15: #{tpu_custom_call.1} parent=1 // pred_check_branch
      %36 = sbr.rel (0) target = $region17
    $region16: #{tpu_custom_call.1} parent=1 // pred_region
      %37 = dma.done [#allocation4], 128
    $region17: #{tpu_custom_call.1} parent=1 // pred_fallthru
      _
    %38 = vsyncpa [#allocation3], 1
    %39 = vsyncpa [#allocation4], 1

</llo_original>
